<compile_context>
chip_gen: v6e
topology: v6e:2x2x1
jax: 0.10.0
libtpu: 0.0.40
codegen_flags: <defaults>
</compile_context>

<pallas_src>
import functools

import jax
import jax.numpy as jnp
from jax import lax
from jax.experimental import pallas as pl
from jax.experimental.pallas import tpu as pltpu


def _round_up(x, m):
    return (x + m - 1) // m * m


def _mdrnn_cell_kernel(xh_ref, c_ref, w_lstm_ref, b_lstm_ref,
                       w_gmm_ref, b_gmm_ref, out_ref,
                       *, hiddens, gaussians, latents, state_pad):
    H = hiddens
    G = gaussians
    S = gaussians * latents          # flat mu / sigma width

    xh = xh_ref[...]                 # (B, L+A+H)
    c = c_ref[...]                   # (B, H)

    # ---- fused LSTMCell gates: one matmul, one folded bias (order i,f,g,o)
    gates = (jnp.dot(xh, w_lstm_ref[...], preferred_element_type=jnp.float32)
             + b_lstm_ref[...])                                   # (B, 4H)

    # two EUP passes over the whole gate vector, lane-select tanh for g
    sig_all = jax.nn.sigmoid(gates)
    tanh_all = jnp.tanh(gates)
    lane = lax.broadcasted_iota(jnp.int32, gates.shape, 1)
    g_sel = (lane >= 2 * H) & (lane < 3 * H)
    act = jnp.where(g_sel, tanh_all, sig_all)

    i_g = act[:, 0 * H:1 * H]
    f_g = act[:, 1 * H:2 * H]
    g_g = act[:, 2 * H:3 * H]
    o_g = act[:, 3 * H:4 * H]

    c_next = f_g * c + i_g * g_g
    h_next = o_g * jnp.tanh(c_next)

    # ---- gmm_linear on the new hidden state (weights pre-padded to 128 lanes)
    out_full = (jnp.dot(h_next, w_gmm_ref[...],
                        preferred_element_type=jnp.float32)
                + b_gmm_ref[...])                                 # (B, gmm_pad)

    lane2 = lax.broadcasted_iota(jnp.int32, out_full.shape, 1)
    sig_mask = (lane2 >= S) & (lane2 < 2 * S)
    pi_mask = (lane2 >= 2 * S) & (lane2 < 2 * S + G)

    # masked, numerically-stable log_softmax restricted to the pi lanes
    masked_pi = jnp.where(pi_mask, out_full, -jnp.inf)
    m = jnp.max(masked_pi, axis=-1, keepdims=True)
    z = jnp.where(pi_mask, jnp.exp(out_full - m), 0.0)
    lse = jnp.log(jnp.sum(z, axis=-1, keepdims=True)) + m
    logpi_full = out_full - lse

    # mus / r / d raw, sigmas exp()'d, pi -> log_softmax; pad lanes stay 0-ish
    gmm_packed = jnp.where(sig_mask, jnp.exp(out_full),
                           jnp.where(pi_mask, logpi_full, out_full))

    # ---- single lane-dense output slab: [gmm_pad | h_next | c_next | zeros]
    pieces = [gmm_packed, h_next, c_next]
    if state_pad:
        pieces.append(jnp.zeros((h_next.shape[0], state_pad), jnp.float32))
    out_ref[...] = jnp.concatenate(pieces, axis=1)


def mdrnn_cell(x, hidden, params, *, latents, actions, hiddens, gaussians):
    """One MD-RNN step.  Returns (mus, sigmas, logpi, r, d, (h_next, c_next))."""
    del actions  # implied by x.shape[1] - latents
    h, c = hidden
    (w_lstm, b_lstm, w_gmm, b_gmm) = params
    B = x.shape[0]
    stride = gaussians * latents
    out_dim = 2 * stride + gaussians + 2
    gmm_pad = _round_up(out_dim, 128)
    assert w_gmm.shape[1] == gmm_pad, "w_gmm must be lane-padded at init"
    state_w = _round_up(2 * hiddens, 128)
    state_pad = state_w - 2 * hiddens
    total = gmm_pad + state_w

    # fuse the two LSTM matmul inputs on the host side (single-step API)
    xh = jnp.concatenate([x, h], axis=1)                     # (B, L+A+H)

    kernel = functools.partial(_mdrnn_cell_kernel,
                               hiddens=hiddens,
                               gaussians=gaussians,
                               latents=latents,
                               state_pad=state_pad)

    vmem = lambda: pl.BlockSpec(memory_space=pltpu.MemorySpace.VMEM)

    slab = pl.pallas_call(
        kernel,
        out_shape=jax.ShapeDtypeStruct((B, total), jnp.float32),
        in_specs=[vmem() for _ in range(6)],
        out_specs=vmem(),
    )(xh, c, w_lstm, b_lstm, w_gmm, b_gmm)

    # unpack the slab in the wrapper (pure layout plumbing)
    mus = slab[:, 0:stride].reshape(B, gaussians, latents)
    sigmas = slab[:, stride:2 * stride].reshape(B, gaussians, latents)
    logpi = slab[:, 2 * stride:2 * stride + gaussians]
    r = slab[:, 2 * stride + gaussians:2 * stride + gaussians + 1]
    d = slab[:, 2 * stride + gaussians + 1:2 * stride + gaussians + 2]
    h_next = slab[:, gmm_pad:gmm_pad + hiddens]
    c_next = slab[:, gmm_pad + hiddens:gmm_pad + 2 * hiddens]
    return mus, sigmas, logpi, r, d, (h_next, c_next)


def init_params(key, *, latents, actions, hiddens, gaussians):
    """Deterministic synthetic parameters, pre-fused/padded for the kernel."""
    in_dim = latents + actions
    out_dim = (2 * latents + 1) * gaussians + 2
    gmm_pad = _round_up(out_dim, 128)
    ks = jax.random.split(key, 6)
    scale = 0.1
    # nn.LSTMCell-equivalent weights, stored pre-transposed (in, out)
    w_ih = scale * jax.random.normal(ks[0], (in_dim, 4 * hiddens), jnp.float32)
    w_hh = scale * jax.random.normal(ks[1], (hiddens, 4 * hiddens), jnp.float32)
    b_ih = scale * jax.random.normal(ks[2], (1, 4 * hiddens), jnp.float32)
    b_hh = scale * jax.random.normal(ks[3], (1, 4 * hiddens), jnp.float32)
    w_gmm = scale * jax.random.normal(ks[4], (hiddens, out_dim), jnp.float32)
    b_gmm = scale * jax.random.normal(ks[5], (1, out_dim), jnp.float32)
    # constant-fold: stack LSTM weights, fold biases, lane-pad the GMM head
    w_lstm = jnp.concatenate([w_ih, w_hh], axis=0)            # (L+A+H, 4H)
    b_lstm = b_ih + b_hh                                      # (1, 4H)
    w_gmm_p = jnp.pad(w_gmm, ((0, 0), (0, gmm_pad - out_dim)))
    b_gmm_p = jnp.pad(b_gmm, ((0, 0), (0, gmm_pad - out_dim)))
    return (w_lstm, b_lstm, w_gmm_p, b_gmm_p)


def _reference(x, hidden, params, *, latents, hiddens, gaussians):
    """Pure-JAX reference with identical semantics (for a sanity check)."""
    h, c = hidden
    (w_lstm, b_lstm, w_gmm, b_gmm) = params
    B = x.shape[0]
    H = hiddens
    xh = jnp.concatenate([x, h], axis=1)
    gates = xh @ w_lstm + b_lstm
    i_g = jax.nn.sigmoid(gates[:, 0 * H:1 * H])
    f_g = jax.nn.sigmoid(gates[:, 1 * H:2 * H])
    g_g = jnp.tanh(gates[:, 2 * H:3 * H])
    o_g = jax.nn.sigmoid(gates[:, 3 * H:4 * H])
    c_n = f_g * c + i_g * g_g
    h_n = o_g * jnp.tanh(c_n)
    out = h_n @ w_gmm + b_gmm
    s = gaussians * latents
    mus = out[:, 0:s].reshape(B, gaussians, latents)
    sigmas = jnp.exp(out[:, s:2 * s]).reshape(B, gaussians, latents)
    logpi = jax.nn.log_softmax(out[:, 2 * s:2 * s + gaussians], axis=-1)
    r = out[:, 2 * s + gaussians:2 * s + gaussians + 1]
    d = out[:, 2 * s + gaussians + 1:2 * s + gaussians + 2]
    return mus, sigmas, logpi, r, d, (h_n, c_n)


if __name__ == "__main__":
    LATENTS, ACTIONS, HIDDENS, GAUSSIANS = 8, 4, 32, 5
    B = 2

    key = jax.random.PRNGKey(0)
    k_x, k_h, k_c, k_p = jax.random.split(key, 4)

    x = jax.random.normal(k_x, (B, LATENTS + ACTIONS), jnp.float32)
    h0 = jax.random.normal(k_h, (B, HIDDENS), jnp.float32)
    c0 = jax.random.normal(k_c, (B, HIDDENS), jnp.float32)
    params = init_params(k_p, latents=LATENTS, actions=ACTIONS,
                         hiddens=HIDDENS, gaussians=GAUSSIANS)

    mus, sigmas, logpi, r, d, (h1, c1) = mdrnn_cell(
        x, (h0, c0), params,
        latents=LATENTS, actions=ACTIONS, hiddens=HIDDENS, gaussians=GAUSSIANS)
    jax.block_until_ready((mus, sigmas, logpi, r, d, h1, c1))

    assert mus.shape == (B, GAUSSIANS, LATENTS)
    assert sigmas.shape == (B, GAUSSIANS, LATENTS)
    assert logpi.shape == (B, GAUSSIANS)
    assert r.shape == (B, 1) and d.shape == (B, 1)
    assert h1.shape == (B, HIDDENS) and c1.shape == (B, HIDDENS)

    # numerical sanity check vs. pure-JAX reference
    ref = _reference(x, (h0, c0), params,
                     latents=LATENTS, hiddens=HIDDENS, gaussians=GAUSSIANS)
    r_mus, r_sig, r_lp, r_r, r_d, (r_h, r_c) = ref
    tol = dict(rtol=5e-2, atol=5e-2)
    assert jnp.allclose(mus, r_mus, **tol)
    assert jnp.allclose(sigmas, r_sig, **tol)
    assert jnp.allclose(logpi, r_lp, **tol)
    assert jnp.allclose(r, r_r, **tol) and jnp.allclose(d, r_d, **tol)
    assert jnp.allclose(h1, r_h, **tol) and jnp.allclose(c1, r_c, **tol)

    print("KERNEL_OK")
</pallas_src>

<mosaic_0001>
module attributes {stable_mosaic.version = 11 : i64} {
  func.func @_mdrnn_cell_kernel(%arg0: memref<2x44xf32, #tpu.memory_space<vmem>>, %arg1: memref<2x32xf32, #tpu.memory_space<vmem>>, %arg2: memref<44x128xf32, #tpu.memory_space<vmem>>, %arg3: memref<1x128xf32, #tpu.memory_space<vmem>>, %arg4: memref<32x128xf32, #tpu.memory_space<vmem>>, %arg5: memref<1x128xf32, #tpu.memory_space<vmem>>, %arg6: memref<2x256xf32, #tpu.memory_space<vmem>>) attributes {dimension_semantics = [], scalar_prefetch = 0 : i64, scratch_operands = 0 : i64, tpu.core_type = #tpu.core_type<tc>} {
    %c0 = arith.constant 0 : index
    %c0_0 = arith.constant 0 : index
    %0 = vector.load %arg0[%c0, %c0_0] : memref<2x44xf32, #tpu.memory_space<vmem>>, vector<2x44xf32>
    %c0_1 = arith.constant 0 : index
    %c0_2 = arith.constant 0 : index
    %1 = vector.load %arg1[%c0_1, %c0_2] : memref<2x32xf32, #tpu.memory_space<vmem>>, vector<2x32xf32>
    %c0_3 = arith.constant 0 : index
    %c0_4 = arith.constant 0 : index
    %2 = vector.load %arg2[%c0_3, %c0_4] : memref<44x128xf32, #tpu.memory_space<vmem>>, vector<44x128xf32>
    %cst = arith.constant dense<0.000000e+00> : vector<2x128xf32>
    %3 = tpu.matmul %0, %2, %cst {dimension_numbers = #tpu.dot_dimension_numbers<[1], [0], [0], [1], [0, 0, 1, 1], [], []>} : vector<2x44xf32>, vector<44x128xf32>, vector<2x128xf32> -> vector<2x128xf32>
    %c0_5 = arith.constant 0 : index
    %c0_6 = arith.constant 0 : index
    %4 = vector.load %arg3[%c0_5, %c0_6] : memref<1x128xf32, #tpu.memory_space<vmem>>, vector<1x128xf32>
    %5 = vector.broadcast %4 : vector<1x128xf32> to vector<2x128xf32>
    %6 = arith.addf %3, %5 : vector<2x128xf32>
    %7 = arith.negf %6 : vector<2x128xf32>
    %8 = math.exp %7 : vector<2x128xf32>
    %cst_7 = arith.constant 1.000000e+00 : f32
    %9 = vector.broadcast %cst_7 : f32 to vector<2x128xf32>
    %10 = arith.addf %9, %8 : vector<2x128xf32>
    %11 = arith.divf %9, %10 : vector<2x128xf32>
    %12 = math.tanh %6 : vector<2x128xf32>
    %13 = tpu.iota {dimensions = array<i32: 1>} : vector<2x128xi32>
    %c64_i32 = arith.constant 64 : i32
    %14 = vector.broadcast %c64_i32 : i32 to vector<2x128xi32>
    %15 = arith.cmpi sge, %13, %14 : vector<2x128xi32>
    %c96_i32 = arith.constant 96 : i32
    %16 = vector.broadcast %c96_i32 : i32 to vector<2x128xi32>
    %17 = arith.cmpi slt, %13, %16 : vector<2x128xi32>
    %18 = arith.andi %15, %17 : vector<2x128xi1>
    %19 = arith.select %18, %12, %11 : vector<2x128xi1>, vector<2x128xf32>
    %20 = vector.extract_strided_slice %19 {offsets = [0, 0], sizes = [2, 32], strides = [1, 1]} : vector<2x128xf32> to vector<2x32xf32>
    %21 = vector.extract_strided_slice %19 {offsets = [0, 32], sizes = [2, 32], strides = [1, 1]} : vector<2x128xf32> to vector<2x32xf32>
    %22 = vector.extract_strided_slice %19 {offsets = [0, 64], sizes = [2, 32], strides = [1, 1]} : vector<2x128xf32> to vector<2x32xf32>
    %23 = vector.extract_strided_slice %19 {offsets = [0, 96], sizes = [2, 32], strides = [1, 1]} : vector<2x128xf32> to vector<2x32xf32>
    %24 = arith.mulf %21, %1 : vector<2x32xf32>
    %25 = arith.mulf %20, %22 : vector<2x32xf32>
    %26 = arith.addf %24, %25 : vector<2x32xf32>
    %27 = math.tanh %26 : vector<2x32xf32>
    %28 = arith.mulf %23, %27 : vector<2x32xf32>
    %c0_8 = arith.constant 0 : index
    %c0_9 = arith.constant 0 : index
    %29 = vector.load %arg4[%c0_8, %c0_9] : memref<32x128xf32, #tpu.memory_space<vmem>>, vector<32x128xf32>
    %cst_10 = arith.constant dense<0.000000e+00> : vector<2x128xf32>
    %30 = tpu.matmul %28, %29, %cst_10 {dimension_numbers = #tpu.dot_dimension_numbers<[1], [0], [0], [1], [0, 0, 1, 1], [], []>} : vector<2x32xf32>, vector<32x128xf32>, vector<2x128xf32> -> vector<2x128xf32>
    %c0_11 = arith.constant 0 : index
    %c0_12 = arith.constant 0 : index
    %31 = vector.load %arg5[%c0_11, %c0_12] : memref<1x128xf32, #tpu.memory_space<vmem>>, vector<1x128xf32>
    %32 = vector.broadcast %31 : vector<1x128xf32> to vector<2x128xf32>
    %33 = arith.addf %30, %32 : vector<2x128xf32>
    %34 = tpu.iota {dimensions = array<i32: 1>} : vector<2x128xi32>
    %c40_i32 = arith.constant 40 : i32
    %35 = vector.broadcast %c40_i32 : i32 to vector<2x128xi32>
    %36 = arith.cmpi sge, %34, %35 : vector<2x128xi32>
    %c80_i32 = arith.constant 80 : i32
    %37 = vector.broadcast %c80_i32 : i32 to vector<2x128xi32>
    %38 = arith.cmpi slt, %34, %37 : vector<2x128xi32>
    %39 = arith.andi %36, %38 : vector<2x128xi1>
    %c80_i32_13 = arith.constant 80 : i32
    %40 = vector.broadcast %c80_i32_13 : i32 to vector<2x128xi32>
    %41 = arith.cmpi sge, %34, %40 : vector<2x128xi32>
    %c85_i32 = arith.constant 85 : i32
    %42 = vector.broadcast %c85_i32 : i32 to vector<2x128xi32>
    %43 = arith.cmpi slt, %34, %42 : vector<2x128xi32>
    %44 = arith.andi %41, %43 : vector<2x128xi1>
    %cst_14 = arith.constant 0xFF800000 : f32
    %45 = vector.broadcast %cst_14 : f32 to vector<2x128xf32>
    %46 = arith.select %44, %33, %45 : vector<2x128xi1>, vector<2x128xf32>
    %cst_15 = arith.constant dense<0xFF800000> : vector<2xf32>
    %47 = vector.multi_reduction <maximumf>, %46, %cst_15 [1] : vector<2x128xf32> to vector<2xf32>
    %48 = vector.shape_cast %47 : vector<2xf32> to vector<2x1xf32>
    %49 = vector.broadcast %48 : vector<2x1xf32> to vector<2x128xf32>
    %50 = arith.subf %33, %49 : vector<2x128xf32>
    %51 = math.exp %50 : vector<2x128xf32>
    %cst_16 = arith.constant 0.000000e+00 : f32
    %52 = vector.broadcast %cst_16 : f32 to vector<2x128xf32>
    %53 = arith.select %44, %51, %52 : vector<2x128xi1>, vector<2x128xf32>
    %cst_17 = arith.constant dense<0.000000e+00> : vector<2xf32>
    %54 = vector.multi_reduction <add>, %53, %cst_17 [1] : vector<2x128xf32> to vector<2xf32>
    %55 = vector.shape_cast %54 : vector<2xf32> to vector<2x1xf32>
    %56 = math.log %55 : vector<2x1xf32>
    %57 = arith.addf %56, %48 : vector<2x1xf32>
    %58 = vector.broadcast %57 : vector<2x1xf32> to vector<2x128xf32>
    %59 = arith.subf %33, %58 : vector<2x128xf32>
    %60 = math.exp %33 : vector<2x128xf32>
    %61 = arith.select %44, %59, %33 : vector<2x128xi1>, vector<2x128xf32>
    %62 = arith.select %39, %60, %61 : vector<2x128xi1>, vector<2x128xf32>
    %cst_18 = arith.constant 0.000000e+00 : f32
    %63 = vector.broadcast %cst_18 : f32 to vector<2x64xf32>
    %64 = tpu.concatenate %62, %28, %26, %63 in 1 : vector<2x128xf32>, vector<2x32xf32>, vector<2x32xf32>, vector<2x64xf32> -> vector<2x256xf32>
    %c0_19 = arith.constant 0 : index
    %c0_20 = arith.constant 0 : index
    %65 = vector.load %arg6[%c0_19, %c0_20] : memref<2x256xf32, #tpu.memory_space<vmem>>, vector<2x256xf32>
    tpu.vector_store %arg6[%c0_19, %c0_20], %64 {strides = array<i32>} : memref<2x256xf32, #tpu.memory_space<vmem>>, vector<2x256xf32>,
    return
  }
}

</mosaic_0001>

<llo_original>
// kernel: tpu_custom_call.1
$region0: #{tpu_custom_call.1}
  #allocation0 [shape = 'u32[]', space=smem, size = 0x4, offset = 0x4, fixed_abs, tag = 'smem constant byte address 0x4 - core index']
  #allocation1 [shape = 'u32[144,128]{1,0:T(1,128)}', space=vmem, size = 0x12000, scoped, tag = 'internal scratch']
  %s0 = inlined_call_operand.hbm [shape: f32[2,44], index: 0, kind: input, shape index: {}]
  %s1 = inlined_call_operand.hbm [shape: f32[2,32], index: 1, kind: input, shape index: {}]
  %s2 = inlined_call_operand.hbm [shape: f32[44,128], index: 2, kind: input, shape index: {}]
  %s3 = inlined_call_operand.vmem [shape: f32[1,128], index: 3, kind: input, shape index: {}]
  %s4 = inlined_call_operand.hbm [shape: f32[32,128], index: 4, kind: input, shape index: {}]
  %s5 = inlined_call_operand.vmem [shape: f32[1,128], index: 5, kind: input, shape index: {}]
  %s6 = inlined_call_operand.hbm [shape: f32[2,256], index: 6, kind: output, shape index: {}]
  %s7 = sld [smem:[#allocation0]]
  $region50: #{tpu_custom_call.1} parent=0
    _
  %s9 = ssub.s32 1, %s7
  %s10 = scalar_select 0, %s9, %s7
  $region1: #{tpu_custom_call.1} parent=0
    #allocation2 [shape = 'u8[1024]{0}', space=vmem, size = 0x400, scoped, tag = 'input window, operand 0, single buffered']
    #allocation3 [shape = 's32[1]{0}', space=sflag, size = 0x4, scoped, tag = 'scoped memory for tpu_custom_call.1']
    #allocation4 [shape = 's32[1]{0}', space=sflag, size = 0x4, scoped, tag = 'scoped memory for tpu_custom_call.1']
    #allocation5 [shape = 'u8[1024]{0}', space=vmem, size = 0x400, scoped, tag = 'input window, operand 1, single buffered']
    #allocation6 [shape = 's32[1]{0}', space=sflag, size = 0x4, scoped, tag = 'scoped memory for tpu_custom_call.1']
    #allocation7 [shape = 'u8[24576]{0}', space=vmem, size = 0x6000, scoped, tag = 'input window, operand 2, single buffered']
    #allocation8 [shape = 'u8[16384]{0}', space=vmem, size = 0x4000, scoped, tag = 'input window, operand 4, single buffered']
    #allocation9 [shape = 's32[1]{0}', space=sflag, size = 0x4, scoped, tag = 'scoped memory for tpu_custom_call.1']
    #allocation10 [shape = 'u8[2048]{0}', space=vmem, size = 0x800, scoped, tag = 'output window, operand 0, single buffered']
    %11 = vsyncpa [#allocation3], 0
    %12 = vsyncpa [#allocation6], 0
    %13 = vsyncpa [#allocation9], 0
    %14 = vsyncpa [#allocation4], 0
    // Predicated region
    $region2: #{tpu_custom_call.1} parent=1 // pred_check
      _
    $region3: #{tpu_custom_call.1} parent=1 // pred_check_branch
      %16 = sbr.rel (0) target = $region5
    $region4: #{tpu_custom_call.1} parent=1 // pred_region
      %s18 = ssub.s32 32, 32
      %19 = vsyncadd [#allocation3], %s18
      %s21 = sshll.u32 [#allocation2], 4
      %s22 = int_to_ptr.vmem [resolvable:$true] %s21
      %24 = dma.hbm_to_vmem [thread:$0]  %s0, 32, %s22, [#allocation3]
    $region5: #{tpu_custom_call.1} parent=1 // pred_fallthru
      _
    // Predicated region
    $region6: #{tpu_custom_call.1} parent=1 // pred_check
      _
    $region7: #{tpu_custom_call.1} parent=1 // pred_check_branch
      %26 = sbr.rel (0) target = $region9
    $region8: #{tpu_custom_call.1} parent=1 // pred_region
      %s28 = ssub.s32 32, 32
      %29 = vsyncadd [#allocation6], %s28
      %s31 = sshll.u32 [#allocation5], 4
      %s32 = int_to_ptr.vmem [resolvable:$true] %s31
      %34 = dma.hbm_to_vmem [thread:$0]  %s1, 32, %s32, [#allocation6]
    $region9: #{tpu_custom_call.1} parent=1 // pred_fallthru
      _
    // Predicated region
    $region10: #{tpu_custom_call.1} parent=1 // pred_check
      _
    $region11: #{tpu_custom_call.1} parent=1 // pred_check_branch
      %36 = sbr.rel (0) target = $region13
    $region12: #{tpu_custom_call.1} parent=1 // pred_region
      %s38 = ssub.s32 768, 768
      %39 = vsyncadd [#allocation6], %s38
      %s40 = sshll.u32 [#allocation7], 4
      %s41 = int_to_ptr.vmem [resolvable:$true] %s40
      %46 = dma.hbm_to_vmem [thread:$0]  %s2, 768, %s41, [#allocation6], 128, 128, 8
    $region13: #{tpu_custom_call.1} parent=1 // pred_fallthru
      _
    // Predicated region
    $region14: #{tpu_custom_call.1} parent=1 // pred_check
      _
    $region15: #{tpu_custom_call.1} parent=1 // pred_check_branch
      %48 = sbr.rel (0) target = $region17
    $region16: #{tpu_custom_call.1} parent=1 // pred_region
      _
    $region17: #{tpu_custom_call.1} parent=1 // pred_fallthru
      _
    // Predicated region
    $region18: #{tpu_custom_call.1} parent=1 // pred_check
      _
    $region19: #{tpu_custom_call.1} parent=1 // pred_check_branch
      %50 = sbr.rel (0) target = $region21
    $region20: #{tpu_custom_call.1} parent=1 // pred_region
      %s52 = ssub.s32 512, 512
      %53 = vsyncadd [#allocation9], %s52
      %s54 = sshll.u32 [#allocation8], 4
      %s55 = int_to_ptr.vmem [resolvable:$true] %s54
      %60 = dma.hbm_to_vmem [thread:$0]  %s4, 512, %s55, [#allocation9], 128, 128, 8
    $region21: #{tpu_custom_call.1} parent=1 // pred_fallthru
      _
    // Predicated region
    $region22: #{tpu_custom_call.1} parent=1 // pred_check
      _
    $region23: #{tpu_custom_call.1} parent=1 // pred_check_branch
      %62 = sbr.rel (0) target = $region25
    $region24: #{tpu_custom_call.1} parent=1 // pred_region
      _
    $region25: #{tpu_custom_call.1} parent=1 // pred_fallthru
      _
    // Predicated region
    $region26: #{tpu_custom_call.1} parent=1 // pred_check
      _
    $region27: #{tpu_custom_call.1} parent=1 // pred_check_branch
      %64 = sbr.rel (0) target = $region29
    $region28: #{tpu_custom_call.1} parent=1 // pred_region
      %65 = dma.done [#allocation3], 32
    $region29: #{tpu_custom_call.1} parent=1 // pred_fallthru
      _
    // Predicated region
    $region30: #{tpu_custom_call.1} parent=1 // pred_check
      _
    $region31: #{tpu_custom_call.1} parent=1 // pred_check_branch
      %67 = sbr.rel (0) target = $region33
    $region32: #{tpu_custom_call.1} parent=1 // pred_region
      %68 = dma.done [#allocation6], 32
    $region33: #{tpu_custom_call.1} parent=1 // pred_fallthru
      _
    // Predicated region
    $region34: #{tpu_custom_call.1} parent=1 // pred_check
      _
    $region35: #{tpu_custom_call.1} parent=1 // pred_check_branch
      %70 = sbr.rel (0) target = $region37
    $region36: #{tpu_custom_call.1} parent=1 // pred_region
      %71 = dma.done [#allocation6], 768
    $region37: #{tpu_custom_call.1} parent=1 // pred_fallthru
      _
    // Predicated region
    $region38: #{tpu_custom_call.1} parent=1 // pred_check
      _
    $region39: #{tpu_custom_call.1} parent=1 // pred_check_branch
      %73 = sbr.rel (0) target = $region41
    $region40: #{tpu_custom_call.1} parent=1 // pred_region
      %74 = dma.done [#allocation9], 512
    $region41: #{tpu_custom_call.1} parent=1 // pred_fallthru
      _
    %v75 = vld [vmem:[#allocation2] sm:$0x3]
    %v76 = vld [vmem:[#allocation5] sm:$0x3]
    %v77 = vld [vmem:[#allocation7] sm:$0xff]
    %v78 = vld [vmem:[#allocation7 + $0x8] sm:$0xff]
    %v79 = vld [vmem:[#allocation7 + $0x10] sm:$0xff]
    %v80 = vld [vmem:[#allocation7 + $0x18] sm:$0xff]
    %v81 = vld [vmem:[#allocation7 + $0x20] sm:$0xff]
    %v82 = vld [vmem:[#allocation7 + $0x28] sm:$0xf]
    %v83 = vld [vmem:[%s3] sm:$0x1]
    %v85 = vlaneseq
    %v86 = vshrl.u32 %v85, 7
    %v87 = vsub.s32 0, %v86
    %v88 = vrot.slane %v83, %v87
    %vm90 = vcmask 359424
    %v92 = vsel %vm90, %v75, 0
    %vm94 = vcmask 1043456
    %v96 = vsel %vm94, %v82, 0
    %98 = vmatprep.subr.mxu0 0.0
    %99 = vmatpush1.msra.mxu0 0.0
    %100 = vmatprep.subr.mxu0 0.0
    %101 = vmatpush1.msra.mxu0 0.0
    %102 = vmatprep.subr.mxu0 0.0
    %103 = vmatpush1.msra.mxu0 0.0
    %104 = vmatprep.subr.mxu0 0.0
    %105 = vmatpush1.msra.mxu0 0.0
    %106 = vmatprep.subr.mxu0 0.0
    %107 = vmatpush1.msra.mxu0 0.0
    %108 = vmatprep.subr.mxu0 0.0
    %109 = vmatpush1.msra.mxu0 0.0
    %110 = vmatprep.subr.mxu0 0.0
    %111 = vmatpush1.msra.mxu0 0.0
    %112 = vmatprep.subr.mxu0 0.0
    %113 = vmatpush1.msra.mxu0 0.0
    %114 = vmatprep.subr.mxu0 0.0
    %115 = vmatpush1.msra.mxu0 0.0
    %116 = vmatprep.subr.mxu0 0.0
    %117 = vmatpush1.msra.mxu0 0.0
    %118 = vmatprep.subr.mxu0 0.0
    %119 = vmatpush1.msra.mxu0 %v96
    %120 = vmatprep.subr.mxu0 0.0
    %121 = vmatpush1.msra.mxu0 %v81
    %122 = vmatprep.subr.mxu0 0.0
    %123 = vmatpush1.msra.mxu0 %v80
    %124 = vmatprep.subr.mxu0 0.0
    %125 = vmatpush1.msra.mxu0 %v79
    %126 = vmatprep.subr.mxu0 0.0
    %127 = vmatpush1.msra.mxu0 %v78
    %128 = vmatprep.subr.mxu0 0.0
    %129 = vmatpush1.msra.mxu0 %v77
    %130 = vmatprep.subr.mxu0 0.0
    %131 = vmatpush2.msra.mxu0 0.0
    %132 = vmatprep.subr.mxu0 0.0
    %133 = vmatpush2.msra.mxu0 0.0
    %134 = vmatprep.subr.mxu0 0.0
    %135 = vmatpush2.msra.mxu0 0.0
    %136 = vmatprep.subr.mxu0 0.0
    %137 = vmatpush2.msra.mxu0 0.0
    %138 = vmatprep.subr.mxu0 0.0
    %139 = vmatpush2.msra.mxu0 0.0
    %140 = vmatprep.subr.mxu0 0.0
    %141 = vmatpush2.msra.mxu0 0.0
    %142 = vmatprep.subr.mxu0 0.0
    %143 = vmatpush2.msra.mxu0 0.0
    %144 = vmatprep.subr.mxu0 0.0
    %145 = vmatpush2.msra.mxu0 0.0
    %146 = vmatprep.subr.mxu0 0.0
    %147 = vmatpush2.msra.mxu0 0.0
    %148 = vmatprep.subr.mxu0 0.0
    %149 = vmatpush2.msra.mxu0 0.0
    %150 = vmatprep.subr.mxu0 0.0
    %151 = vmatpush2.msra.mxu0 0.0
    %152 = vmatprep.subr.mxu0 0.0
    %153 = vmatpush2.msra.mxu0 0.0
    %154 = vmatprep.subr.mxu0 0.0
    %155 = vmatpush2.msra.mxu0 0.0
    %156 = vmatprep.subr.mxu0 0.0
    %157 = vmatpush2.msra.mxu0 0.0
    %158 = vmatprep.subr.mxu0 0.0
    %159 = vmatpush2.msra.mxu0 0.0
    %160 = vmatprep.subr.mxu0 0.0
    %161 = vmatpush2.msra.mxu0 0.0
    %162 = vmatprep.mubr.f32.mxu0 0.0
    %163 = vmatmul.mubr.f32.gmra.mxu0 %v92
    %v164 = vpop.f32.mrf.mxu0
    %v165 = vadd.f32 %v88, %v164
    %v166 = vpop.f32.mrf.mxu0
    %167 = vdwg.mxu0
    %v168 = vxor.u32 %v165, 2147483648
    %v169 = vmul.f32 %v168, 1.442695
    %v170 = vpow.pop %v169
    %v171 = vadd.f32 %v170, 1.0
    %v172 = vrcp.pop %v171
    %v173 = vmul.f32 1.0, %v172
    %v174 = vtanh.pop %v165
    %v175 = vlaneseq
    %v176 = vand.u32 %v175, 127
    %vm177 = vcmp.ge.s32.totalorder %v176, 64
    %vm178 = vcmp.lt.s32.totalorder %v176, 96
    %vm179 = vmand %vm177, %vm178
    %v180 = vsel %vm179, %v174, %v173
    %182 = vrot.lane.b32.xlu0 %v76, 32
    %v183 = vpop.permute.xlu0 %182
    %v185 = vmul.f32 %v180, %v183
    %187 = vrot.lane.b32.xlu0 %v180, 64
    %v188 = vpop.permute.xlu0 %187
    %v190 = vmul.f32 %v180, %v188
    %192 = vrot.lane.b32.xlu0 %v190, 32
    %v193 = vpop.permute.xlu0 %192
    %v195 = vadd.f32 %v185, %v193
    %v196 = vtanh.pop %v195
    %198 = vrot.lane.b32.xlu0 %v196, 64
    %v199 = vpop.permute.xlu0 %198
    %v201 = vmul.f32 %v180, %v199
    %v202 = vld [vmem:[#allocation8] sm:$0xff]
    %v203 = vld [vmem:[#allocation8 + $0x8] sm:$0xff]
    %v204 = vld [vmem:[#allocation8 + $0x10] sm:$0xff]
    %v205 = vld [vmem:[#allocation8 + $0x18] sm:$0xff]
    %v206 = vld [vmem:[%s5] sm:$0x1]
    %v208 = vlaneseq
    %v209 = vshrl.u32 %v208, 7
    %v210 = vsub.s32 0, %v209
    %v211 = vrot.slane %v206, %v210
    %214 = vrot.lane.b32.xlu0 %v201, 32
    %v215 = vpop.permute.xlu0 %214
    %vm216 = vcmask 261120
    %v217 = vsel %vm216, %v215, 0
    %219 = vmatprep.subr.mxu0 0.0
    %220 = vmatpush1.msra.mxu0 0.0
    %221 = vmatprep.subr.mxu0 0.0
    %222 = vmatpush1.msra.mxu0 0.0
    %223 = vmatprep.subr.mxu0 0.0
    %224 = vmatpush1.msra.mxu0 0.0
    %225 = vmatprep.subr.mxu0 0.0
    %226 = vmatpush1.msra.mxu0 0.0
    %227 = vmatprep.subr.mxu0 0.0
    %228 = vmatpush1.msra.mxu0 0.0
    %229 = vmatprep.subr.mxu0 0.0
    %230 = vmatpush1.msra.mxu0 0.0
    %231 = vmatprep.subr.mxu0 0.0
    %232 = vmatpush1.msra.mxu0 0.0
    %233 = vmatprep.subr.mxu0 0.0
    %234 = vmatpush1.msra.mxu0 0.0
    %235 = vmatprep.subr.mxu0 0.0
    %236 = vmatpush1.msra.mxu0 0.0
    %237 = vmatprep.subr.mxu0 0.0
    %238 = vmatpush1.msra.mxu0 0.0
    %239 = vmatprep.subr.mxu0 0.0
    %240 = vmatpush1.msra.mxu0 0.0
    %241 = vmatprep.subr.mxu0 0.0
    %242 = vmatpush1.msra.mxu0 0.0
    %243 = vmatprep.subr.mxu0 0.0
    %244 = vmatpush1.msra.mxu0 %v205
    %245 = vmatprep.subr.mxu0 0.0
    %246 = vmatpush1.msra.mxu0 %v204
    %247 = vmatprep.subr.mxu0 0.0
    %248 = vmatpush1.msra.mxu0 %v203
    %249 = vmatprep.subr.mxu0 0.0
    %250 = vmatpush1.msra.mxu0 %v202
    %251 = vmatprep.subr.mxu0 0.0
    %252 = vmatpush2.msra.mxu0 0.0
    %253 = vmatprep.subr.mxu0 0.0
    %254 = vmatpush2.msra.mxu0 0.0
    %255 = vmatprep.subr.mxu0 0.0
    %256 = vmatpush2.msra.mxu0 0.0
    %257 = vmatprep.subr.mxu0 0.0
    %258 = vmatpush2.msra.mxu0 0.0
    %259 = vmatprep.subr.mxu0 0.0
    %260 = vmatpush2.msra.mxu0 0.0
    %261 = vmatprep.subr.mxu0 0.0
    %262 = vmatpush2.msra.mxu0 0.0
    %263 = vmatprep.subr.mxu0 0.0
    %264 = vmatpush2.msra.mxu0 0.0
    %265 = vmatprep.subr.mxu0 0.0
    %266 = vmatpush2.msra.mxu0 0.0
    %267 = vmatprep.subr.mxu0 0.0
    %268 = vmatpush2.msra.mxu0 0.0
    %269 = vmatprep.subr.mxu0 0.0
    %270 = vmatpush2.msra.mxu0 0.0
    %271 = vmatprep.subr.mxu0 0.0
    %272 = vmatpush2.msra.mxu0 0.0
    %273 = vmatprep.subr.mxu0 0.0
    %274 = vmatpush2.msra.mxu0 0.0
    %275 = vmatprep.subr.mxu0 0.0
    %276 = vmatpush2.msra.mxu0 0.0
    %277 = vmatprep.subr.mxu0 0.0
    %278 = vmatpush2.msra.mxu0 0.0
    %279 = vmatprep.subr.mxu0 0.0
    %280 = vmatpush2.msra.mxu0 0.0
    %281 = vmatprep.subr.mxu0 0.0
    %282 = vmatpush2.msra.mxu0 0.0
    %283 = vmatprep.mubr.f32.mxu0 0.0
    %284 = vmatmul.mubr.f32.gmra.mxu0 %v217
    %v285 = vpop.f32.mrf.mxu0
    %v286 = vadd.f32 %v211, %v285
    %v287 = vpop.f32.mrf.mxu0
    %288 = vdwg.mxu0
    %vm289 = vcmp.ge.s32.totalorder %v176, 40
    %vm290 = vcmp.lt.s32.totalorder %v176, 80
    %vm291 = vmand %vm289, %vm290
    %vm292 = vcmp.ge.s32.totalorder %v176, 80
    %vm293 = vcmp.lt.s32.totalorder %v176, 85
    %vm294 = vmand %vm292, %vm293
    %v295 = vsel %vm294, %v286, -inf
    %vm296 = vcmask 1041408
    %v297 = vsel %vm296, %v295, -inf
    %298 = vmax.xlane.f32.xlu0 %v297
    %v299 = vpop.xlane.xlu0 %298
    %v300 = vsub.f32 %v286, %v299
    %v301 = vmul.f32 %v300, 1.442695
    %v302 = vpow.pop %v301
    %v303 = vsel %vm294, %v302, 0.0
    %v304 = vsel %vm296, %v303, 0.0
    %305 = vadd.xlane.f32.xlu0 %v304
    %v306 = vpop.xlane.xlu0 %305
    %v307 = vlog2.pop %v306
    %v308 = vmul.f32 %v307, 0.6931472
    %v309 = vadd.f32 %v308, %v299
    %v310 = vsub.f32 %v286, %v309
    %v311 = vmul.f32 %v286, 1.442695
    %v312 = vpow.pop %v311
    %v313 = vsel %vm294, %v310, %v286
    %v314 = vsel %vm291, %v312, %v313
    %v316 = vsel %vm216, %v215, %v195
    %vm317 = vcmask 523264
    %v318 = vsel %vm317, %v316, 0.0
    %v321 = vcombine.low %v314, %v318
    %v323 = vunpack.c.l.s4 1983009808
    %v324 = vunpack.c.0.s8 %v323
    %v325 = vlaneseq
    %v326 = vshrl.u32 %v325, 7
    %v327 = vsub.s32 %v324, %v326
    %v328 = vrot.slane %v321, %v327
    %330 = vst [vmem:[#allocation10] sm:$0xf] %v328
    // Predicated region
    $region42: #{tpu_custom_call.1} parent=1 // pred_check
      _
    $region43: #{tpu_custom_call.1} parent=1 // pred_check_branch
      %332 = sbr.rel (0) target = $region45
    $region44: #{tpu_custom_call.1} parent=1 // pred_region
      %s334 = ssub.s32 64, 64
      %335 = vsyncadd [#allocation4], %s334
      %s337 = sshll.u32 [#allocation10], 4
      %s338 = int_to_ptr.vmem [resolvable:$true] %s337
      %340 = dma.vmem_to_hbm [thread:$0]  %s338, 64, %s6, [#allocation4]
    $region45: #{tpu_custom_call.1} parent=1 // pred_fallthru
      _
    // Predicated region
    $region46: #{tpu_custom_call.1} parent=1 // pred_check
      _
    $region47: #{tpu_custom_call.1} parent=1 // pred_check_branch
      %342 = sbr.rel (0) target = $region49
    $region48: #{tpu_custom_call.1} parent=1 // pred_region
      %343 = dma.done [#allocation4], 64
    $region49: #{tpu_custom_call.1} parent=1 // pred_fallthru
      _
    %344 = vsyncpa [#allocation3], 1
    %345 = vsyncpa [#allocation6], 1
    %346 = vsyncpa [#allocation9], 1
    %347 = vsyncpa [#allocation4], 1

</llo_original>
